<compile_context>
chip_gen: v6e
topology: v6e:2x2x1
jax: 0.10.0
libtpu: 0.0.40
codegen_flags: <defaults>
</compile_context>

<pallas_src>
import functools

import jax
import jax.numpy as jnp
import numpy as np
from jax.experimental import pallas as pl
from jax.experimental.pallas import tpu as pltpu

_LANE = 128


def _dice_bce_kernel(pred_ref, gt_ref, out_ref, *,
                     valid_rows, pos_weight, smooth_factor, ignore_index,
                     block_rows, chunk_rows, n_chunks, stride, overlap,
                     needs_row_mask):
    c = pl.program_id(0)          # megacore split ("parallel")
    i = pl.program_id(1)          # per-core block index ("arbitrary" reduction axis)
    bi = c * stride + i           # logical block index into the (rows, 128) view

    @pl.when(i == 0)
    def _init():
        out_ref[...] = jnp.zeros_like(out_ref)

    sub = chunk_rows // 8

    def _accumulate():
        row0 = bi * block_rows    # global row offset of this block (fits int32 easily)

        def chunk_body(ck, carry):
            inter_a, p_a, t_a, bce_a = carry
            off = pl.multiple_of(ck * chunk_rows, chunk_rows)
            x = pred_ref[pl.ds(off, chunk_rows), :].astype(jnp.float32)
            t = gt_ref[pl.ds(off, chunk_rows), :].astype(jnp.float32)

            if needs_row_mask:
                # Row-level validity (no flat-index product -> no int32 overflow).
                r = jax.lax.broadcasted_iota(jnp.int32, (chunk_rows, _LANE), 0)
                valid = (row0 + off + r) < valid_rows
                vf = valid.astype(jnp.float32)
                # Mask BEFORE the transcendentals so OOB garbage can't produce NaN/Inf.
                x = jnp.where(valid, x, 0.0)
                t = jnp.where(valid, t, 0.0)

            # Fused transcendentals: 3 EUP pushes / element.
            sp = jax.nn.softplus(-x)          # softplus(-x)
            p = jnp.exp(-sp)                  # sigmoid(x)
            soft_t = (1.0 - t) * smooth_factor + t * (1.0 - smooth_factor)
            one_m = 1.0 - soft_t
            # BCEWithLogits(x, soft_t, pw) = pw*soft_t*softplus(-x) + (1-soft_t)*softplus(x)
            #                              = sp*(pw*soft_t + 1 - soft_t) + (1-soft_t)*x
            bce = sp * (pos_weight * soft_t + one_m) + one_m * x
            bce = bce * (t != ignore_index).astype(jnp.float32)
            if needs_row_mask:
                p = p * vf
                bce = bce * vf

            def psum(v):                      # (chunk_rows,128) -> (8,128): VPU-only adds
                return jnp.sum(v.reshape(sub, 8, _LANE), axis=0)

            return (inter_a + psum(p * t), p_a + psum(p),
                    t_a + psum(t), bce_a + psum(bce))

        zero = jnp.zeros((8, _LANE), jnp.float32)
        inter_a, p_a, t_a, bce_a = jax.lax.fori_loop(
            0, n_chunks, chunk_body, (zero, zero, zero, zero), unroll=True)
        out_ref[0, 0] += inter_a              # intersection: sum sigmoid(pred) * gt
        out_ref[0, 1] += p_a                  # sum sigmoid(pred)
        out_ref[0, 2] += t_a                  # sum gt
        out_ref[0, 3] += bce_a                # bce sum

    if overlap > 0:
        # Core 1 skips the overlap iteration it would otherwise double-count.
        @pl.when(jnp.logical_not(jnp.logical_and(c == 1, i < overlap)))
        def _():
            _accumulate()
    else:
        _accumulate()


def _sublane_align(dtype):
    return {4: 8, 2: 16, 1: 32}[jnp.dtype(dtype).itemsize]


def _partial_sums_jax(x, t, *, pos_weight, smooth_factor, ignore_index):
    # Tiny plain-JAX epilogue for the ragged (< 128-element) tail / tiny inputs.
    x = x.astype(jnp.float32)
    t = t.astype(jnp.float32)
    sp = jax.nn.softplus(-x)
    p = jnp.exp(-sp)
    soft_t = (1.0 - t) * smooth_factor + t * (1.0 - smooth_factor)
    one_m = 1.0 - soft_t
    bce = sp * (pos_weight * soft_t + one_m) + one_m * x
    bce = bce * (t != ignore_index)
    return jnp.sum(p * t), jnp.sum(p), jnp.sum(t), jnp.sum(bce)


def dice_bce_loss(pred, gt, *, mode="binary", from_logits=True, smooth=0.1,
                  pos_weight=2.0, eps=1e-7, ignore_index=-100.0,
                  smooth_factor=None, block_rows=4096, chunk_rows=512):
    """DiceBCE forward: DiceLoss(binary, from_logits, smooth) + SoftBCEWithLogitsLoss."""
    if mode != "binary" or not from_logits:
        # TODO(synk): multiclass/multilabel Dice modes not implemented (module uses binary+logits).
        raise NotImplementedError("only mode='binary', from_logits=True is implemented")
    if smooth_factor is None:
        smooth_factor = smooth            # the PyTorch module ties them

    total = int(pred.size)
    assert int(gt.size) == total

    if gt.dtype == jnp.bool_:
        gt = gt.astype(jnp.int8)          # upcast to f32 happens in-kernel

    pred_flat = pred.reshape(-1)
    gt_flat = gt.reshape(-1)

    row_align = max(_sublane_align(pred.dtype), _sublane_align(gt.dtype))
    rows = total // _LANE                 # complete 128-lane rows -> kernel domain
    consts = dict(pos_weight=float(pos_weight), smooth_factor=float(smooth_factor),
                  ignore_index=float(ignore_index))

    inter = jnp.float32(0.0)
    p_sum = jnp.float32(0.0)
    t_sum = jnp.float32(0.0)
    bce_sum = jnp.float32(0.0)
    covered = 0

    if rows >= row_align:
        if rows * _LANE == total:
            pf = pred_flat.reshape(rows, _LANE)   # free view of contiguous NCHW
            gf = gt_flat.reshape(rows, _LANE)
        else:
            # TODO(synk): the prefix slice may still materialize a copy for the custom-call
            # operand; only ragged (total % 128 != 0) shapes take this path.
            pf = pred_flat[:rows * _LANE].reshape(rows, _LANE)
            gf = gt_flat[:rows * _LANE].reshape(rows, _LANE)

        # Compute chunk (bounds in-kernel temporaries) and DMA block (amortizes per-step cost).
        chunk = min(int(chunk_rows), int(block_rows), rows)
        chunk = max(row_align, (chunk // row_align) * row_align)
        br = min(int(block_rows), rows)
        br = max(chunk, (br // chunk) * chunk)
        n_chunks = br // chunk

        n_blocks = pl.cdiv(rows, br)
        n_inner = pl.cdiv(n_blocks, 2)        # per-core blocks (v7x megacore split)
        stride = n_blocks - n_inner
        overlap = 2 * n_inner - n_blocks      # 0 or 1
        needs_row_mask = (n_blocks * br != rows)

        kernel = functools.partial(
            _dice_bce_kernel, valid_rows=rows, block_rows=br, chunk_rows=chunk,
            n_chunks=n_chunks, stride=stride, overlap=overlap,
            needs_row_mask=needs_row_mask, **consts)

        def in_map(c, i):
            # Core 1 remaps its skipped overlap iteration onto the next block it will
            # actually process, so the pipeliner elides the redundant HBM fetch.
            return (c * stride + jnp.minimum(jnp.maximum(i, c * overlap), n_inner - 1), 0)

        in_bytes = pf.size * pf.dtype.itemsize + gf.size * gf.dtype.itemsize
        cost = pl.CostEstimate(flops=20 * rows * _LANE,
                               transcendentals=3 * rows * _LANE,
                               bytes_accessed=in_bytes + 2 * 4 * 8 * _LANE * 4)

        partials = pl.pallas_call(
            kernel,
            out_shape=jax.ShapeDtypeStruct((2, 4, 8, _LANE), jnp.float32),
            grid=(2, n_inner),
            in_specs=[pl.BlockSpec((br, _LANE), in_map),
                      pl.BlockSpec((br, _LANE), in_map)],
            out_specs=pl.BlockSpec((1, 4, 8, _LANE), lambda c, i: (c, 0, 0, 0)),
            compiler_params=pltpu.CompilerParams(
                dimension_semantics=("parallel", "arbitrary"),
                vmem_limit_bytes=32 * 1024 * 1024),
            cost_estimate=cost,
        )(pf, gf)

        parts = jnp.sum(partials, axis=(0, 2, 3))     # combine cores + lanes: (4,)
        inter, p_sum, t_sum, bce_sum = parts[0], parts[1], parts[2], parts[3]
        covered = rows * _LANE

    if covered < total:
        ti, tp, tt, tb = _partial_sums_jax(pred_flat[covered:], gt_flat[covered:], **consts)
        inter = inter + ti
        p_sum = p_sum + tp
        t_sum = t_sum + tt
        bce_sum = bce_sum + tb

    card = p_sum + t_sum
    dice_score = (2.0 * inter + smooth) / jnp.maximum(card + smooth, eps)
    # smp DiceLoss zeroes the loss for empty classes, then means over classes (1 class here).
    dice_loss = (1.0 - dice_score) * (t_sum > 0).astype(jnp.float32)
    bce_mean = bce_sum / jnp.float32(total)
    return dice_loss + bce_mean


def _reference(pred, gt, *, smooth=0.1, pos_weight=2.0, eps=1e-7, ignore_index=-100.0):
    # Plain-JAX reference mirroring smp DiceLoss(binary) + SoftBCEWithLogitsLoss.
    x = pred.astype(jnp.float32)
    t = gt.astype(jnp.float32)
    p = jax.nn.sigmoid(x).reshape(pred.shape[0], 1, -1)
    tt = t.reshape(pred.shape[0], 1, -1)
    inter = jnp.sum(p * tt, axis=(0, 2))
    card = jnp.sum(p, axis=(0, 2)) + jnp.sum(tt, axis=(0, 2))
    score = (2.0 * inter + smooth) / jnp.maximum(card + smooth, eps)
    dice = jnp.mean((1.0 - score) * (jnp.sum(tt, axis=(0, 2)) > 0))
    soft_t = (1.0 - t) * smooth + t * (1.0 - smooth)
    bce = pos_weight * soft_t * jax.nn.softplus(-x) + (1.0 - soft_t) * jax.nn.softplus(x)
    bce = bce * (t != ignore_index)
    return dice + jnp.mean(bce)


if __name__ == "__main__":
    key = jax.random.PRNGKey(0)
    # Binary segmentation: pred logits (N, 1, H, W), gt in {0, 1} of the same shape.
    # Shapes exercise: single block / idle second core, multi-block with megacore overlap
    # remap, ragged last block (row mask), ragged sub-row tail (JAX epilogue), and the
    # tiny-input pure-JAX fallback.
    cases = [
        ((2, 1, 64, 64), {}),
        ((2, 1, 128, 192), dict(block_rows=128)),
        ((2, 1, 500, 400), {}),
        ((2, 1, 100, 72), {}),
        ((2, 1, 5, 20), {}),
    ]
    for shape, kw in cases:
        key, k1, k2 = jax.random.split(key, 3)
        pred = jax.random.normal(k1, shape, dtype=jnp.float32)
        gt = (jax.random.uniform(k2, shape) > 0.5).astype(jnp.float32)

        loss = jax.block_until_ready(
            dice_bce_loss(pred, gt, smooth=0.1, pos_weight=2.0, **kw))
        ref = jax.block_until_ready(_reference(pred, gt, smooth=0.1, pos_weight=2.0))
        np.testing.assert_allclose(np.asarray(loss), np.asarray(ref),
                                   rtol=1e-4, atol=1e-5)
    print("KERNEL_OK")
</pallas_src>

<mosaic_0001>
module attributes {stable_mosaic.version = 11 : i64} {
  func.func @_dice_bce_kernel(%arg0: i32, %arg1: i32, %arg2: memref<64x128xf32, #tpu.memory_space<vmem>>, %arg3: memref<64x128xf32, #tpu.memory_space<vmem>>, %arg4: memref<1x4x8x128xf32, #tpu.memory_space<vmem>>) attributes {dimension_semantics = [#tpu.dimension_semantics<parallel>, #tpu.dimension_semantics<arbitrary>], iteration_bounds = array<i64: 2, 1>, scalar_prefetch = 0 : i64, scratch_operands = 0 : i64, tpu.core_type = #tpu.core_type<tc>, window_params = [{transform_indices = @transform_0, window_bounds = array<i64: 64, 128>}, {transform_indices = @transform_1, window_bounds = array<i64: 64, 128>}, {transform_indices = @transform_2, window_bounds = array<i64: 1, 4, 8, 128>}]} {
    %c0_i32 = arith.constant 0 : i32
    %0 = arith.cmpi eq, %arg1, %c0_i32 : i32
    %1 = arith.extui %0 : i1 to i32
    %c0_i32_0 = arith.constant 0 : i32
    %2 = arith.cmpi ne, %1, %c0_i32_0 : i32
    scf.if %2 {
      %cst = arith.constant 0.000000e+00 : f32
      %9 = vector.broadcast %cst : f32 to vector<1x4x8x128xf32>
      %c0 = arith.constant 0 : index
      %c0_3 = arith.constant 0 : index
      %c0_4 = arith.constant 0 : index
      %c0_5 = arith.constant 0 : index
      %10 = vector.load %arg4[%c0, %c0_3, %c0_4, %c0_5] : memref<1x4x8x128xf32, #tpu.memory_space<vmem>>, vector<1x4x8x128xf32>
      tpu.vector_store %arg4[%c0, %c0_3, %c0_4, %c0_5], %9 {strides = array<i32>} : memref<1x4x8x128xf32, #tpu.memory_space<vmem>>, vector<1x4x8x128xf32>,
    } else {
    }
    %c1_i32 = arith.constant 1 : i32
    %3 = arith.cmpi eq, %arg0, %c1_i32 : i32
    %c1_i32_1 = arith.constant 1 : i32
    %4 = arith.cmpi slt, %arg1, %c1_i32_1 : i32
    %5 = arith.andi %3, %4 : i1
    %true = arith.constant true
    %6 = arith.xori %5, %true : i1
    %7 = arith.extui %6 : i1 to i32
    %c0_i32_2 = arith.constant 0 : i32
    %8 = arith.cmpi ne, %7, %c0_i32_2 : i32
    scf.if %8 {
      %cst = arith.constant 0.000000e+00 : f32
      %9 = vector.broadcast %cst : f32 to vector<8x128xf32>
      %c0_i32_3 = arith.constant 0 : i32
      %c64_i32 = arith.constant 64 : i32
      %10 = arith.muli %c0_i32_3, %c64_i32 : i32
      %11 = tpu.assume_multiple %10, 64 : i32
      %12 = arith.index_cast %11 : i32 to index
      %c0 = arith.constant 0 : index
      %13 = vector.load %arg2[%12, %c0] : memref<64x128xf32, #tpu.memory_space<vmem>>, vector<64x128xf32>
      %14 = arith.index_cast %11 : i32 to index
      %c0_4 = arith.constant 0 : index
      %15 = vector.load %arg3[%14, %c0_4] : memref<64x128xf32, #tpu.memory_space<vmem>>, vector<64x128xf32>
      %cst_5 = arith.constant 0.000000e+00 : f32
      %16 = vector.broadcast %cst_5 : f32 to vector<64x128xf32>
      %17 = arith.subf %16, %13 : vector<64x128xf32>
      %cst_6 = arith.constant 0.000000e+00 : f32
      %18 = vector.broadcast %cst_6 : f32 to vector<64x128xf32>
      %19 = arith.maximumf %17, %18 : vector<64x128xf32>
      %20 = vector.broadcast %cst_6 : f32 to vector<64x128xf32>
      %21 = arith.subf %17, %20 : vector<64x128xf32>
      %22 = arith.cmpf one, %21, %21 : vector<64x128xf32>
      %23 = vector.broadcast %cst_6 : f32 to vector<64x128xf32>
      %24 = arith.addf %17, %23 : vector<64x128xf32>
      %25 = math.absf %21 : vector<64x128xf32>
      %cst_7 = arith.constant 0.000000e+00 : f32
      %26 = vector.broadcast %cst_7 : f32 to vector<64x128xf32>
      %27 = arith.subf %26, %25 : vector<64x128xf32>
      %28 = math.exp %27 : vector<64x128xf32>
      %29 = math.log1p %28 : vector<64x128xf32>
      %30 = arith.addf %19, %29 : vector<64x128xf32>
      %31 = arith.select %22, %24, %30 : vector<64x128xi1>, vector<64x128xf32>
      %cst_8 = arith.constant 0.000000e+00 : f32
      %32 = vector.broadcast %cst_8 : f32 to vector<64x128xf32>
      %33 = arith.subf %32, %31 : vector<64x128xf32>
      %34 = math.exp %33 : vector<64x128xf32>
      %cst_9 = arith.constant 1.000000e+00 : f32
      %35 = vector.broadcast %cst_9 : f32 to vector<64x128xf32>
      %36 = arith.subf %35, %15 : vector<64x128xf32>
      %cst_10 = arith.constant 1.000000e-01 : f32
      %37 = vector.broadcast %cst_10 : f32 to vector<64x128xf32>
      %38 = arith.mulf %36, %37 : vector<64x128xf32>
      %cst_11 = arith.constant 0.899999976 : f32
      %39 = vector.broadcast %cst_11 : f32 to vector<64x128xf32>
      %40 = arith.mulf %15, %39 : vector<64x128xf32>
      %41 = arith.addf %38, %40 : vector<64x128xf32>
      %cst_12 = arith.constant 1.000000e+00 : f32
      %42 = vector.broadcast %cst_12 : f32 to vector<64x128xf32>
      %43 = arith.subf %42, %41 : vector<64x128xf32>
      %cst_13 = arith.constant 2.000000e+00 : f32
      %44 = vector.broadcast %cst_13 : f32 to vector<64x128xf32>
      %45 = arith.mulf %44, %41 : vector<64x128xf32>
      %46 = arith.addf %45, %43 : vector<64x128xf32>
      %47 = arith.mulf %31, %46 : vector<64x128xf32>
      %48 = arith.mulf %43, %13 : vector<64x128xf32>
      %49 = arith.addf %47, %48 : vector<64x128xf32>
      %cst_14 = arith.constant -1.000000e+02 : f32
      %50 = vector.broadcast %cst_14 : f32 to vector<64x128xf32>
      %51 = arith.cmpf one, %15, %50 : vector<64x128xf32>
      %52 = arith.extui %51 : vector<64x128xi1> to vector<64x128xi32>
      %53 = arith.sitofp %52 : vector<64x128xi32> to vector<64x128xf32>
      %54 = arith.mulf %49, %53 : vector<64x128xf32>
      %55 = arith.mulf %34, %15 : vector<64x128xf32>
      %56 = vector.shape_cast %55 : vector<64x128xf32> to vector<8x8x128xf32>
      %cst_15 = arith.constant dense<0.000000e+00> : vector<8x128xf32>
      %57 = vector.multi_reduction <add>, %56, %cst_15 [0] : vector<8x8x128xf32> to vector<8x128xf32>
      %58 = arith.addf %9, %57 : vector<8x128xf32>
      %59 = vector.shape_cast %34 : vector<64x128xf32> to vector<8x8x128xf32>
      %cst_16 = arith.constant dense<0.000000e+00> : vector<8x128xf32>
      %60 = vector.multi_reduction <add>, %59, %cst_16 [0] : vector<8x8x128xf32> to vector<8x128xf32>
      %61 = arith.addf %9, %60 : vector<8x128xf32>
      %62 = vector.shape_cast %15 : vector<64x128xf32> to vector<8x8x128xf32>
      %cst_17 = arith.constant dense<0.000000e+00> : vector<8x128xf32>
      %63 = vector.multi_reduction <add>, %62, %cst_17 [0] : vector<8x8x128xf32> to vector<8x128xf32>
      %64 = arith.addf %9, %63 : vector<8x128xf32>
      %65 = vector.shape_cast %54 : vector<64x128xf32> to vector<8x8x128xf32>
      %cst_18 = arith.constant dense<0.000000e+00> : vector<8x128xf32>
      %66 = vector.multi_reduction <add>, %65, %cst_18 [0] : vector<8x8x128xf32> to vector<8x128xf32>
      %67 = arith.addf %9, %66 : vector<8x128xf32>
      %c1_i32_19 = arith.constant 1 : i32
      %c0_20 = arith.constant 0 : index
      %c0_21 = arith.constant 0 : index
      %c0_22 = arith.constant 0 : index
      %c0_23 = arith.constant 0 : index
      %68 = vector.load %arg4[%c0_20, %c0_21, %c0_22, %c0_23] : memref<1x4x8x128xf32, #tpu.memory_space<vmem>>, vector<1x1x8x128xf32>
      %69 = vector.shape_cast %68 : vector<1x1x8x128xf32> to vector<8x128xf32>
      %70 = arith.addf %69, %58 : vector<8x128xf32>
      %c0_24 = arith.constant 0 : index
      %c0_25 = arith.constant 0 : index
      %c0_26 = arith.constant 0 : index
      %c0_27 = arith.constant 0 : index
      %71 = vector.load %arg4[%c0_24, %c0_25, %c0_26, %c0_27] : memref<1x4x8x128xf32, #tpu.memory_space<vmem>>, vector<1x1x8x128xf32>
      %72 = vector.shape_cast %71 : vector<1x1x8x128xf32> to vector<8x128xf32>
      %73 = vector.shape_cast %70 : vector<8x128xf32> to vector<1x1x8x128xf32>
      tpu.vector_store %arg4[%c0_24, %c0_25, %c0_26, %c0_27], %73 {strides = array<i32>} : memref<1x4x8x128xf32, #tpu.memory_space<vmem>>, vector<1x1x8x128xf32>,
      %c0_28 = arith.constant 0 : index
      %c1 = arith.constant 1 : index
      %c0_29 = arith.constant 0 : index
      %c0_30 = arith.constant 0 : index
      %74 = vector.load %arg4[%c0_28, %c1, %c0_29, %c0_30] : memref<1x4x8x128xf32, #tpu.memory_space<vmem>>, vector<1x1x8x128xf32>
      %75 = vector.shape_cast %74 : vector<1x1x8x128xf32> to vector<8x128xf32>
      %76 = arith.addf %75, %61 : vector<8x128xf32>
      %c0_31 = arith.constant 0 : index
      %c1_32 = arith.constant 1 : index
      %c0_33 = arith.constant 0 : index
      %c0_34 = arith.constant 0 : index
      %77 = vector.load %arg4[%c0_31, %c1_32, %c0_33, %c0_34] : memref<1x4x8x128xf32, #tpu.memory_space<vmem>>, vector<1x1x8x128xf32>
      %78 = vector.shape_cast %77 : vector<1x1x8x128xf32> to vector<8x128xf32>
      %79 = vector.shape_cast %76 : vector<8x128xf32> to vector<1x1x8x128xf32>
      tpu.vector_store %arg4[%c0_31, %c1_32, %c0_33, %c0_34], %79 {strides = array<i32>} : memref<1x4x8x128xf32, #tpu.memory_space<vmem>>, vector<1x1x8x128xf32>,
      %c0_35 = arith.constant 0 : index
      %c2 = arith.constant 2 : index
      %c0_36 = arith.constant 0 : index
      %c0_37 = arith.constant 0 : index
      %80 = vector.load %arg4[%c0_35, %c2, %c0_36, %c0_37] : memref<1x4x8x128xf32, #tpu.memory_space<vmem>>, vector<1x1x8x128xf32>
      %81 = vector.shape_cast %80 : vector<1x1x8x128xf32> to vector<8x128xf32>
      %82 = arith.addf %81, %64 : vector<8x128xf32>
      %c0_38 = arith.constant 0 : index
      %c2_39 = arith.constant 2 : index
      %c0_40 = arith.constant 0 : index
      %c0_41 = arith.constant 0 : index
      %83 = vector.load %arg4[%c0_38, %c2_39, %c0_40, %c0_41] : memref<1x4x8x128xf32, #tpu.memory_space<vmem>>, vector<1x1x8x128xf32>
      %84 = vector.shape_cast %83 : vector<1x1x8x128xf32> to vector<8x128xf32>
      %85 = vector.shape_cast %82 : vector<8x128xf32> to vector<1x1x8x128xf32>
      tpu.vector_store %arg4[%c0_38, %c2_39, %c0_40, %c0_41], %85 {strides = array<i32>} : memref<1x4x8x128xf32, #tpu.memory_space<vmem>>, vector<1x1x8x128xf32>,
      %c0_42 = arith.constant 0 : index
      %c3 = arith.constant 3 : index
      %c0_43 = arith.constant 0 : index
      %c0_44 = arith.constant 0 : index
      %86 = vector.load %arg4[%c0_42, %c3, %c0_43, %c0_44] : memref<1x4x8x128xf32, #tpu.memory_space<vmem>>, vector<1x1x8x128xf32>
      %87 = vector.shape_cast %86 : vector<1x1x8x128xf32> to vector<8x128xf32>
      %88 = arith.addf %87, %67 : vector<8x128xf32>
      %c0_45 = arith.constant 0 : index
      %c3_46 = arith.constant 3 : index
      %c0_47 = arith.constant 0 : index
      %c0_48 = arith.constant 0 : index
      %89 = vector.load %arg4[%c0_45, %c3_46, %c0_47, %c0_48] : memref<1x4x8x128xf32, #tpu.memory_space<vmem>>, vector<1x1x8x128xf32>
      %90 = vector.shape_cast %89 : vector<1x1x8x128xf32> to vector<8x128xf32>
      %91 = vector.shape_cast %88 : vector<8x128xf32> to vector<1x1x8x128xf32>
      tpu.vector_store %arg4[%c0_45, %c3_46, %c0_47, %c0_48], %91 {strides = array<i32>} : memref<1x4x8x128xf32, #tpu.memory_space<vmem>>, vector<1x1x8x128xf32>,
    } else {
    }
    return
  }
  func.func @transform_0(%arg0: i32, %arg1: i32) -> (i32, i32) {
    %c0_i32 = arith.constant 0 : i32
    %0 = arith.muli %arg0, %c0_i32 : i32
    %c1_i32 = arith.constant 1 : i32
    %1 = arith.muli %arg0, %c1_i32 : i32
    %2 = arith.maxsi %arg1, %1 : i32
    %c0_i32_0 = arith.constant 0 : i32
    %3 = arith.minsi %2, %c0_i32_0 : i32
    %4 = arith.addi %0, %3 : i32
    %c0_i32_1 = arith.constant 0 : i32
    %c0_i32_2 = arith.constant 0 : i32
    return %4, %c0_i32_1 : i32, i32
  }
  func.func @transform_1(%arg0: i32, %arg1: i32) -> (i32, i32) {
    %c0_i32 = arith.constant 0 : i32
    %0 = arith.muli %arg0, %c0_i32 : i32
    %c1_i32 = arith.constant 1 : i32
    %1 = arith.muli %arg0, %c1_i32 : i32
    %2 = arith.maxsi %arg1, %1 : i32
    %c0_i32_0 = arith.constant 0 : i32
    %3 = arith.minsi %2, %c0_i32_0 : i32
    %4 = arith.addi %0, %3 : i32
    %c0_i32_1 = arith.constant 0 : i32
    %c0_i32_2 = arith.constant 0 : i32
    return %4, %c0_i32_1 : i32, i32
  }
  func.func @transform_2(%arg0: i32, %arg1: i32) -> (i32, i32, i32, i32) {
    %c0_i32 = arith.constant 0 : i32
    %c0_i32_0 = arith.constant 0 : i32
    %c0_i32_1 = arith.constant 0 : i32
    %c0_i32_2 = arith.constant 0 : i32
    return %arg0, %c0_i32, %c0_i32_0, %c0_i32_1 : i32, i32, i32, i32
  }
}

</mosaic_0001>

<llo_original>
// kernel: tpu_custom_call.1
$region0: #{tpu_custom_call.1}
  #allocation0 [shape = 'u32[]', space=smem, size = 0x4, offset = 0x4, fixed_abs, tag = 'smem constant byte address 0x4 - core index']
  #allocation1 [shape = 'u32[144,128]{1,0:T(1,128)}', space=vmem, size = 0x12000, scoped, tag = 'internal scratch']
  %s0 = inlined_call_operand.hbm [shape: f32[64,128], index: 0, kind: input, shape index: {}]
  %s1 = inlined_call_operand.hbm [shape: f32[64,128], index: 1, kind: input, shape index: {}]
  %s2 = inlined_call_operand.hbm [shape: f32[2,4,8,128], index: 2, kind: output, shape index: {}]
  %s3 = sld [smem:[#allocation0]]
  $region57: #{tpu_custom_call.1} parent=0
    _
  %s5 = ssub.s32 1, %s3
  %s6 = scalar_select 0, %s5, %s3
  $region1: #{tpu_custom_call.1} parent=0
    #allocation2 [shape = 'u8[65536]{0}', space=vmem, size = 0x10000, scoped, tag = 'input window, operand 0']
    #allocation3 [shape = 's32[2]{0}', space=sflag, size = 0x8, scoped, tag = 'scoped memory for tpu_custom_call.1']
    #allocation4 [shape = 's32[2]{0}', space=sflag, size = 0x8, scoped, tag = 'scoped memory for tpu_custom_call.1']
    #allocation5 [shape = 'u8[65536]{0}', space=vmem, size = 0x10000, scoped, tag = 'input window, operand 1']
    #allocation6 [shape = 's32[2]{0}', space=sflag, size = 0x8, scoped, tag = 'scoped memory for tpu_custom_call.1']
    #allocation7 [shape = 'u8[32768]{0}', space=vmem, size = 0x8000, scoped, tag = 'output window, operand 0']
    %7 = vsyncpa [#allocation3], 0
    %s8 = scalar_lea.sflag [#allocation3], 1
    %9 = vsyncpa %s8, 0
    %10 = vsyncpa [#allocation6], 0
    %s11 = scalar_lea.sflag [#allocation6], 1
    %12 = vsyncpa %s11, 0
    %13 = vsyncpa [#allocation4], 0
    %s14 = scalar_lea.sflag [#allocation4], 1
    %15 = vsyncpa %s14, 0
    loop: start=0, step=1, limit=4
    $region2: #{tpu_custom_call.1} parent=1 // loop_pre_header
      _
    $region3: #{tpu_custom_call.1} parent=1 // loop_header
      %s17 = sphi 0, %s21
      %p18 = scmp.ge.s32.totalorder %s17, 4
      %s24 = sphi 0, %s36
      %s25 = sphi 0, %s32
      %s26 = sphi 0, %s24
      %s27 = sphi 0, %s25
      %s28 = sphi 0, %s26
      %s29 = sphi 0, %s27
      %s47 = sphi 0, %s49
      %s50 = sphi 0, %s47
      %s51 = sphi 0, %s50
      %s67 = sphi 0, %s51
      %s81 = sphi 0, %s83
      %s84 = sphi 0, %s81
      %s85 = sphi 0, %s84
      %s101 = sphi 0, %s85
      %s107 = sphi 0, %s109
      %s110 = sphi 0, %s107
      %s111 = sphi 0, %s110
      %s127 = sphi 0, %s111
    $region4: #{tpu_custom_call.1} parent=1 // loop_header_branch
      %20 = sbr.rel (%p18) target = $region8
    $region5: #{tpu_custom_call.1} parent=1 // loop_body
      %s22 = ssub.s32 %s17, 1
      %s23 = ssub.s32 %s17, 2
      %s30 = sadd.s32 1, %s25
      %p31 = scmp.ge.s32.totalorder %s30, 1
      %s32 = scalar_select %p31, 0, %s30
      %s33 = sadd.s32 1, %s24
      %s34 = scalar_select %p31, %s33, %s24
      %p35 = scmp.ge.s32.totalorder %s34, 2
      %s36 = scalar_select %p35, 0, %s34
      %p37 = scmp.gt.s32.totalorder %s25, %s24
      %s38 = scalar_select %p37, %s25, %s24
      %p39 = scmp.lt.s32.totalorder %s38, 0
      %s40 = scalar_select %p39, %s38, 0
      %p41 = scmp.gt.s32.totalorder %s32, %s36
      %s42 = scalar_select %p41, %s32, %s36
      %p43 = scmp.lt.s32.totalorder %s42, 0
      %s44 = scalar_select %p43, %s42, 0
      %s45 = ssub.s32 %s40, %s44
      %p46 = scmp.eq.s32.totalorder %s45, 0
      %s48 = sadd.s32 %s47, 1
      %s49 = scalar_select %p46, %s47, %s48
      %p52 = pneg %p46
      %p53 = scmp.eq.s32.totalorder %s17, 1
      %p54 = por %p52, %p53
      %p55 = scmp.ne.s32.totalorder %s47, %s50
      %p56 = scmp.eq.s32.totalorder %s17, 0
      %p57 = por %p55, %p56
      %p58 = scmp.ne.s32.totalorder %s47, %s50
      %p59 = scmp.eq.s32.totalorder %s22, 1
      %p60 = por %p58, %p59
      %p61 = scmp.ne.s32.totalorder %s50, %s51
      %p62 = scmp.eq.s32.totalorder %s22, 0
      %p63 = por %p61, %p62
      %p64 = scmp.ne.s32.totalorder %s50, %s51
      %p65 = scmp.eq.s32.totalorder %s23, 1
      %p66 = por %p64, %p65
      %p68 = scmp.ne.s32.totalorder %s51, %s67
      %p69 = scmp.eq.s32.totalorder %s23, 0
      %p70 = por %p68, %p69
      %p71 = scmp.gt.s32.totalorder %s25, %s24
      %s72 = scalar_select %p71, %s25, %s24
      %p73 = scmp.lt.s32.totalorder %s72, 0
      %s74 = scalar_select %p73, %s72, 0
      %p75 = scmp.gt.s32.totalorder %s32, %s36
      %s76 = scalar_select %p75, %s32, %s36
      %p77 = scmp.lt.s32.totalorder %s76, 0
      %s78 = scalar_select %p77, %s76, 0
      %s79 = ssub.s32 %s74, %s78
      %p80 = scmp.eq.s32.totalorder %s79, 0
      %s82 = sadd.s32 %s81, 1
      %s83 = scalar_select %p80, %s81, %s82
      %p86 = pneg %p80
      %p87 = scmp.eq.s32.totalorder %s17, 1
      %p88 = por %p86, %p87
      %p89 = scmp.ne.s32.totalorder %s81, %s84
      %p90 = scmp.eq.s32.totalorder %s17, 0
      %p91 = por %p89, %p90
      %p92 = scmp.ne.s32.totalorder %s81, %s84
      %p93 = scmp.eq.s32.totalorder %s22, 1
      %p94 = por %p92, %p93
      %p95 = scmp.ne.s32.totalorder %s84, %s85
      %p96 = scmp.eq.s32.totalorder %s22, 0
      %p97 = por %p95, %p96
      %p98 = scmp.ne.s32.totalorder %s84, %s85
      %p99 = scmp.eq.s32.totalorder %s23, 1
      %p100 = por %p98, %p99
      %p102 = scmp.ne.s32.totalorder %s85, %s101
      %p103 = scmp.eq.s32.totalorder %s23, 0
      %p104 = por %p102, %p103
      %s105 = ssub.s32 %s24, %s36
      %p106 = scmp.eq.s32.totalorder %s105, 0
      %s108 = sadd.s32 %s107, 1
      %s109 = scalar_select %p106, %s107, %s108
      %p112 = pneg %p106
      %p113 = scmp.eq.s32.totalorder %s17, 1
      %p114 = por %p112, %p113
      %p115 = scmp.ne.s32.totalorder %s107, %s110
      %p116 = scmp.eq.s32.totalorder %s17, 0
      %p117 = por %p115, %p116
      %p118 = scmp.ne.s32.totalorder %s107, %s110
      %p119 = scmp.eq.s32.totalorder %s22, 1
      %p120 = por %p118, %p119
      %p121 = scmp.ne.s32.totalorder %s110, %s111
      %p122 = scmp.eq.s32.totalorder %s22, 0
      %p123 = por %p121, %p122
      %p124 = scmp.ne.s32.totalorder %s110, %s111
      %p125 = scmp.eq.s32.totalorder %s23, 1
      %p126 = por %p124, %p125
      %p128 = scmp.ne.s32.totalorder %s111, %s127
      %p129 = scmp.eq.s32.totalorder %s23, 0
      %p130 = por %p128, %p129
      %p131 = scmp.le.s32.totalorder 1, %s17
      %p132 = scmp.lt.s32.totalorder %s17, 3
      %p133 = pnand %p131, %p132
      %p134 = pneg %p133
      // Predicated region
      $region9: #{tpu_custom_call.1} parent=5 // pred_check
        _
      $region10: #{tpu_custom_call.1} parent=5 // pred_check_branch
        %136 = sbr.rel (%p133) target = $region12
      $region11: #{tpu_custom_call.1} parent=5 // pred_region
        %s137 = ssub.s32 %s17, 1
      $region12: #{tpu_custom_call.1} parent=5 // pred_fallthru
        _
      %p138 = scmp.lt.s32.totalorder %s17, 2
      // Predicated region
      $region13: #{tpu_custom_call.1} parent=5 // pred_check
        %p139 = pneg %p138
      $region14: #{tpu_custom_call.1} parent=5 // pred_check_branch
        %141 = sbr.rel (%p139) target = $region16
      $region15: #{tpu_custom_call.1} parent=5 // pred_region
        // Predicated region
        $region17: #{tpu_custom_call.1} parent=15 // pred_check
          %p142 = pneg %p57
        $region18: #{tpu_custom_call.1} parent=15 // pred_check_branch
          %144 = sbr.rel (%p142) target = $region20
        $region19: #{tpu_custom_call.1} parent=15 // pred_region
          %s145 = sand.u32 %s47, 1
          %s146 = scalar_lea.sflag [#allocation3], %s145
          %s147 = sand.u32 %s47, 1
          %s148 = smul.addr %s147, 64
          %s149 = scalar_lea.vmem [#allocation2], %s148
          %p150 = scmp.gt.s32.totalorder %s25, %s24
          %s151 = scalar_select %p150, %s25, %s24
          %p152 = scmp.lt.s32.totalorder %s151, 0
          %s153 = scalar_select %p152, %s151, 0
          %s154 = smul.u32 8, %s153
          %s156 = ssub.s32 1024, 1024
          %157 = vsyncadd %s146, %s156
          %s158 = smul.addr %s154, 128
          %s159 = scalar_lea.hbm %s0, %s158
          %s160 = sshll.u32 %s149, 4
          %s161 = int_to_ptr.vmem [resolvable:$true] %s160
          %166 = dma.hbm_to_vmem [thread:$0]  %s159, 1024, %s161, %s146, 128, 128, 8
        $region20: #{tpu_custom_call.1} parent=15 // pred_fallthru
          _
        // Predicated region
        $region21: #{tpu_custom_call.1} parent=15 // pred_check
          %p167 = pneg %p91
        $region22: #{tpu_custom_call.1} parent=15 // pred_check_branch
          %169 = sbr.rel (%p167) target = $region24
        $region23: #{tpu_custom_call.1} parent=15 // pred_region
          %s170 = sand.u32 %s81, 1
          %s171 = scalar_lea.sflag [#allocation6], %s170
          %s172 = sand.u32 %s81, 1
          %s173 = smul.addr %s172, 64
          %s174 = scalar_lea.vmem [#allocation5], %s173
          %p175 = scmp.gt.s32.totalorder %s25, %s24
          %s176 = scalar_select %p175, %s25, %s24
          %p177 = scmp.lt.s32.totalorder %s176, 0
          %s178 = scalar_select %p177, %s176, 0
          %s179 = smul.u32 8, %s178
          %s181 = ssub.s32 1024, 1024
          %182 = vsyncadd %s171, %s181
          %s183 = smul.addr %s179, 128
          %s184 = scalar_lea.hbm %s1, %s183
          %s185 = sshll.u32 %s174, 4
          %s186 = int_to_ptr.vmem [resolvable:$true] %s185
          %191 = dma.hbm_to_vmem [thread:$0]  %s184, 1024, %s186, %s171, 128, 128, 8
        $region24: #{tpu_custom_call.1} parent=15 // pred_fallthru
          _
      $region16: #{tpu_custom_call.1} parent=5 // pred_fallthru
        _
      %p192 = scmp.le.s32.totalorder 1, %s17
      %p193 = scmp.lt.s32.totalorder %s17, 3
      %p194 = pnand %p192, %p193
      %p195 = pneg %p194
      // Predicated region
      $region25: #{tpu_custom_call.1} parent=5 // pred_check
        _
      $region26: #{tpu_custom_call.1} parent=5 // pred_check_branch
        %197 = sbr.rel (%p194) target = $region28
      $region27: #{tpu_custom_call.1} parent=5 // pred_region
        %s198 = ssub.s32 %s17, 1
        %s199 = sand.u32 %s50, 1
        %s200 = scalar_lea.sflag [#allocation3], %s199
        %s201 = sand.u32 %s50, 1
        %s202 = smul.addr %s201, 64
        %s203 = scalar_lea.vmem [#allocation2], %s202
        // Predicated region
        $region29: #{tpu_custom_call.1} parent=27 // pred_check
          %p204 = pneg %p63
        $region30: #{tpu_custom_call.1} parent=27 // pred_check_branch
          %206 = sbr.rel (%p204) target = $region32
        $region31: #{tpu_custom_call.1} parent=27 // pred_region
          %207 = dma.done %s200, 1024
        $region32: #{tpu_custom_call.1} parent=27 // pred_fallthru
          _
        %s208 = sand.u32 %s84, 1
        %s209 = scalar_lea.sflag [#allocation6], %s208
        %s210 = sand.u32 %s84, 1
        %s211 = smul.addr %s210, 64
        %s212 = scalar_lea.vmem [#allocation5], %s211
        // Predicated region
        $region33: #{tpu_custom_call.1} parent=27 // pred_check
          %p213 = pneg %p97
        $region34: #{tpu_custom_call.1} parent=27 // pred_check_branch
          %215 = sbr.rel (%p213) target = $region36
        $region35: #{tpu_custom_call.1} parent=27 // pred_region
          %216 = dma.done %s209, 1024
        $region36: #{tpu_custom_call.1} parent=27 // pred_fallthru
          _
        %s217 = sand.u32 %s50, 1
        %s218 = scalar_lea.sflag [#allocation3], %s217
        %s219 = sand.u32 %s50, 1
        %s220 = smul.addr %s219, 64
        %s221 = scalar_lea.vmem [#allocation2], %s220
        %p222 = pneg %p63
        %p223 = pneg %p60
        %s224 = sand.u32 %s84, 1
        %s225 = scalar_lea.sflag [#allocation6], %s224
        %s226 = sand.u32 %s84, 1
        %s227 = smul.addr %s226, 64
        %s228 = scalar_lea.vmem [#allocation5], %s227
        %p229 = pneg %p97
        %p230 = pneg %p94
        %p231 = pneg %p123
        %p232 = pneg %p120
        %s233 = sand.u32 %s110, 1
        %s234 = scalar_lea.sflag [#allocation4], %s233
        %s235 = sand.u32 %s110, 1
        %s236 = smul.addr %s235, 32
        %s237 = scalar_lea.vmem [#allocation7], %s236
        %p238 = scmp.gt.s32.totalorder %s27, %s26
        %s239 = scalar_select %p238, %s27, %s26
        %p240 = scmp.lt.s32.totalorder %s239, 0
        %s241 = scalar_select %p240, %s239, 0
        %s242 = smul.u32 8, %s241
        %p243 = scmp.gt.s32.totalorder %s27, %s26
        %s244 = scalar_select %p243, %s27, %s26
        %p245 = scmp.lt.s32.totalorder %s244, 0
        %s246 = scalar_select %p245, %s244, 0
        %s247 = smul.u32 8, %s246
        %p248 = scmp.eq.s32.totalorder %s27, 0
        // Predicated region
        $region37: #{tpu_custom_call.1} parent=27 // pred_check
          %p249 = pneg %p248
        $region38: #{tpu_custom_call.1} parent=27 // pred_check_branch
          %251 = sbr.rel (%p249) target = $region40
        $region39: #{tpu_custom_call.1} parent=27 // pred_region
          %252 = vst [vmem:[%s237] sm:$0xff] 0.0
          %253 = vst [vmem:[%s237 + $0x8] sm:$0xff] 0.0
          %254 = vst [vmem:[%s237 + $0x10] sm:$0xff] 0.0
          %255 = vst [vmem:[%s237 + $0x18] sm:$0xff] 0.0
        $region40: #{tpu_custom_call.1} parent=27 // pred_fallthru
          _
        %p256 = scmp.eq.s32.totalorder %s26, 1
        %p257 = scmp.lt.s32.totalorder %s27, 1
        %p258 = pnand %p256, %p257
        %p259 = pneg %p258
        %p260 = pneg %p259
        // Predicated region
        $region41: #{tpu_custom_call.1} parent=27 // pred_check
          _
        $region42: #{tpu_custom_call.1} parent=27 // pred_check_branch
          %262 = sbr.rel (%p259) target = $region44
        $region43: #{tpu_custom_call.1} parent=27 // pred_region
          %v263 = vld [vmem:[%s203] sm:$0xff]
          %v264 = vld [vmem:[%s203 + $0x8] sm:$0xff]
          %v265 = vld [vmem:[%s203 + $0x10] sm:$0xff]
          %v266 = vld [vmem:[%s203 + $0x18] sm:$0xff]
          %v267 = vld [vmem:[%s203 + $0x20] sm:$0xff]
          %v268 = vld [vmem:[%s203 + $0x28] sm:$0xff]
          %v269 = vld [vmem:[%s203 + $0x30] sm:$0xff]
          %v270 = vld [vmem:[%s203 + $0x38] sm:$0xff]
          %v271 = vld [vmem:[%s212] sm:$0xff]
          %v272 = vld [vmem:[%s212 + $0x8] sm:$0xff]
          %v273 = vld [vmem:[%s212 + $0x10] sm:$0xff]
          %v274 = vld [vmem:[%s212 + $0x18] sm:$0xff]
          %v275 = vld [vmem:[%s212 + $0x20] sm:$0xff]
          %v276 = vld [vmem:[%s212 + $0x28] sm:$0xff]
          %v277 = vld [vmem:[%s212 + $0x30] sm:$0xff]
          %v278 = vld [vmem:[%s212 + $0x38] sm:$0xff]
          %v279 = vsub.f32 0.0, %v263
          %v280 = vsub.f32 0.0, %v264
          %v281 = vsub.f32 0.0, %v265
          %v282 = vsub.f32 0.0, %v266
          %v283 = vsub.f32 0.0, %v267
          %v284 = vsub.f32 0.0, %v268
          %v285 = vsub.f32 0.0, %v269
          %v286 = vsub.f32 0.0, %v270
          %v287 = vmax.f32 %v279, 0.0
          %v288 = vmax.f32 %v280, 0.0
          %v289 = vmax.f32 %v281, 0.0
          %v290 = vmax.f32 %v282, 0.0
          %v291 = vmax.f32 %v283, 0.0
          %v292 = vmax.f32 %v284, 0.0
          %v293 = vmax.f32 %v285, 0.0
          %v294 = vmax.f32 %v286, 0.0
          %vm295 = vcmp.ne.f32.partialorder %v279, %v279
          %vm296 = vcmp.ne.f32.partialorder %v280, %v280
          %vm297 = vcmp.ne.f32.partialorder %v281, %v281
          %vm298 = vcmp.ne.f32.partialorder %v282, %v282
          %vm299 = vcmp.ne.f32.partialorder %v283, %v283
          %vm300 = vcmp.ne.f32.partialorder %v284, %v284
          %vm301 = vcmp.ne.f32.partialorder %v285, %v285
          %vm302 = vcmp.ne.f32.partialorder %v286, %v286
          %v303 = vadd.f32 %v279, 0.0
          %v304 = vadd.f32 %v280, 0.0
          %v305 = vadd.f32 %v281, 0.0
          %v306 = vadd.f32 %v282, 0.0
          %v307 = vadd.f32 %v283, 0.0
          %v308 = vadd.f32 %v284, 0.0
          %v309 = vadd.f32 %v285, 0.0
          %v310 = vadd.f32 %v286, 0.0
          %v311 = vand.u32 2147483647, %v279
          %v312 = vand.u32 2147483647, %v280
          %v313 = vand.u32 2147483647, %v281
          %v314 = vand.u32 2147483647, %v282
          %v315 = vand.u32 2147483647, %v283
          %v316 = vand.u32 2147483647, %v284
          %v317 = vand.u32 2147483647, %v285
          %v318 = vand.u32 2147483647, %v286
          %v319 = vsub.f32 0.0, %v311
          %v320 = vsub.f32 0.0, %v312
          %v321 = vsub.f32 0.0, %v313
          %v322 = vsub.f32 0.0, %v314
          %v323 = vsub.f32 0.0, %v315
          %v324 = vsub.f32 0.0, %v316
          %v325 = vsub.f32 0.0, %v317
          %v326 = vsub.f32 0.0, %v318
          %v327 = vmul.f32 %v319, 1.442695
          %v328 = vpow.pop %v327
          %v329 = vmul.f32 %v320, 1.442695
          %v330 = vpow.pop %v329
          %v331 = vmul.f32 %v321, 1.442695
          %v332 = vpow.pop %v331
          %v333 = vmul.f32 %v322, 1.442695
          %v334 = vpow.pop %v333
          %v335 = vmul.f32 %v323, 1.442695
          %v336 = vpow.pop %v335
          %v337 = vmul.f32 %v324, 1.442695
          %v338 = vpow.pop %v337
          %v339 = vmul.f32 %v325, 1.442695
          %v340 = vpow.pop %v339
          %v341 = vmul.f32 %v326, 1.442695
          %v342 = vpow.pop %v341
          %v343 = vadd.f32 %v328, 1.0
          %v344 = vlog2.pop %v343
          %v345 = vmul.f32 %v344, 0.6931472
          %v346 = vmul.f32 -0.5, %v328
          %v347 = vadd.f32 %v346, 1.0
          %v348 = vmul.f32 %v347, %v328
          %v349 = vand.u32 2147483647, %v328
          %vm350 = vcmp.lt.f32.partialorder %v349, 0.0004427343
          %v351 = vsel %vm350, %v348, %v345
          %v352 = vadd.f32 %v330, 1.0
          %v353 = vlog2.pop %v352
          %v354 = vmul.f32 %v353, 0.6931472
          %v355 = vmul.f32 -0.5, %v330
          %v356 = vadd.f32 %v355, 1.0
          %v357 = vmul.f32 %v356, %v330
          %v358 = vand.u32 2147483647, %v330
          %vm359 = vcmp.lt.f32.partialorder %v358, 0.0004427343
          %v360 = vsel %vm359, %v357, %v354
          %v361 = vadd.f32 %v332, 1.0
          %v362 = vlog2.pop %v361
          %v363 = vmul.f32 %v362, 0.6931472
          %v364 = vmul.f32 -0.5, %v332
          %v365 = vadd.f32 %v364, 1.0
          %v366 = vmul.f32 %v365, %v332
          %v367 = vand.u32 2147483647, %v332
          %vm368 = vcmp.lt.f32.partialorder %v367, 0.0004427343
          %v369 = vsel %vm368, %v366, %v363
          %v370 = vadd.f32 %v334, 1.0
          %v371 = vlog2.pop %v370
          %v372 = vmul.f32 %v371, 0.6931472
          %v373 = vmul.f32 -0.5, %v334
          %v374 = vadd.f32 %v373, 1.0
          %v375 = vmul.f32 %v374, %v334
          %v376 = vand.u32 2147483647, %v334
          %vm377 = vcmp.lt.f32.partialorder %v376, 0.0004427343
          %v378 = vsel %vm377, %v375, %v372
          %v379 = vadd.f32 %v336, 1.0
          %v380 = vlog2.pop %v379
          %v381 = vmul.f32 %v380, 0.6931472
          %v382 = vmul.f32 -0.5, %v336
          %v383 = vadd.f32 %v382, 1.0
          %v384 = vmul.f32 %v383, %v336
          %v385 = vand.u32 2147483647, %v336
          %vm386 = vcmp.lt.f32.partialorder %v385, 0.0004427343
          %v387 = vsel %vm386, %v384, %v381
          %v388 = vadd.f32 %v338, 1.0
          %v389 = vlog2.pop %v388
          %v390 = vmul.f32 %v389, 0.6931472
          %v391 = vmul.f32 -0.5, %v338
          %v392 = vadd.f32 %v391, 1.0
          %v393 = vmul.f32 %v392, %v338
          %v394 = vand.u32 2147483647, %v338
          %vm395 = vcmp.lt.f32.partialorder %v394, 0.0004427343
          %v396 = vsel %vm395, %v393, %v390
          %v397 = vadd.f32 %v340, 1.0
          %v398 = vlog2.pop %v397
          %v399 = vmul.f32 %v398, 0.6931472
          %v400 = vmul.f32 -0.5, %v340
          %v401 = vadd.f32 %v400, 1.0
          %v402 = vmul.f32 %v401, %v340
          %v403 = vand.u32 2147483647, %v340
          %vm404 = vcmp.lt.f32.partialorder %v403, 0.0004427343
          %v405 = vsel %vm404, %v402, %v399
          %v406 = vadd.f32 %v342, 1.0
          %v407 = vlog2.pop %v406
          %v408 = vmul.f32 %v407, 0.6931472
          %v409 = vmul.f32 -0.5, %v342
          %v410 = vadd.f32 %v409, 1.0
          %v411 = vmul.f32 %v410, %v342
          %v412 = vand.u32 2147483647, %v342
          %vm413 = vcmp.lt.f32.partialorder %v412, 0.0004427343
          %v414 = vsel %vm413, %v411, %v408
          %v415 = vadd.f32 %v287, %v351
          %v416 = vadd.f32 %v288, %v360
          %v417 = vadd.f32 %v289, %v369
          %v418 = vadd.f32 %v290, %v378
          %v419 = vadd.f32 %v291, %v387
          %v420 = vadd.f32 %v292, %v396
          %v421 = vadd.f32 %v293, %v405
          %v422 = vadd.f32 %v294, %v414
          %v423 = vsel %vm295, %v303, %v415
          %v424 = vsel %vm296, %v304, %v416
          %v425 = vsel %vm297, %v305, %v417
          %v426 = vsel %vm298, %v306, %v418
          %v427 = vsel %vm299, %v307, %v419
          %v428 = vsel %vm300, %v308, %v420
          %v429 = vsel %vm301, %v309, %v421
          %v430 = vsel %vm302, %v310, %v422
          %v431 = vsub.f32 0.0, %v423
          %v432 = vsub.f32 0.0, %v424
          %v433 = vsub.f32 0.0, %v425
          %v434 = vsub.f32 0.0, %v426
          %v435 = vsub.f32 0.0, %v427
          %v436 = vsub.f32 0.0, %v428
          %v437 = vsub.f32 0.0, %v429
          %v438 = vsub.f32 0.0, %v430
          %v439 = vmul.f32 %v431, 1.442695
          %v440 = vpow.pop %v439
          %v441 = vmul.f32 %v432, 1.442695
          %v442 = vpow.pop %v441
          %v443 = vmul.f32 %v433, 1.442695
          %v444 = vpow.pop %v443
          %v445 = vmul.f32 %v434, 1.442695
          %v446 = vpow.pop %v445
          %v447 = vmul.f32 %v435, 1.442695
          %v448 = vpow.pop %v447
          %v449 = vmul.f32 %v436, 1.442695
          %v450 = vpow.pop %v449
          %v451 = vmul.f32 %v437, 1.442695
          %v452 = vpow.pop %v451
          %v453 = vmul.f32 %v438, 1.442695
          %v454 = vpow.pop %v453
          %v455 = vsub.f32 1.0, %v271
          %v456 = vsub.f32 1.0, %v272
          %v457 = vsub.f32 1.0, %v273
          %v458 = vsub.f32 1.0, %v274
          %v459 = vsub.f32 1.0, %v275
          %v460 = vsub.f32 1.0, %v276
          %v461 = vsub.f32 1.0, %v277
          %v462 = vsub.f32 1.0, %v278
          %v463 = vmul.f32 %v455, 0.1
          %v464 = vmul.f32 %v456, 0.1
          %v465 = vmul.f32 %v457, 0.1
          %v466 = vmul.f32 %v458, 0.1
          %v467 = vmul.f32 %v459, 0.1
          %v468 = vmul.f32 %v460, 0.1
          %v469 = vmul.f32 %v461, 0.1
          %v470 = vmul.f32 %v462, 0.1
          %v471 = vmul.f32 %v271, 0.9
          %v472 = vmul.f32 %v272, 0.9
          %v473 = vmul.f32 %v273, 0.9
          %v474 = vmul.f32 %v274, 0.9
          %v475 = vmul.f32 %v275, 0.9
          %v476 = vmul.f32 %v276, 0.9
          %v477 = vmul.f32 %v277, 0.9
          %v478 = vmul.f32 %v278, 0.9
          %v479 = vadd.f32 %v463, %v471
          %v480 = vadd.f32 %v464, %v472
          %v481 = vadd.f32 %v465, %v473
          %v482 = vadd.f32 %v466, %v474
          %v483 = vadd.f32 %v467, %v475
          %v484 = vadd.f32 %v468, %v476
          %v485 = vadd.f32 %v469, %v477
          %v486 = vadd.f32 %v470, %v478
          %v487 = vsub.f32 1.0, %v479
          %v488 = vsub.f32 1.0, %v480
          %v489 = vsub.f32 1.0, %v481
          %v490 = vsub.f32 1.0, %v482
          %v491 = vsub.f32 1.0, %v483
          %v492 = vsub.f32 1.0, %v484
          %v493 = vsub.f32 1.0, %v485
          %v494 = vsub.f32 1.0, %v486
          %v495 = vmul.f32 %v479, 2.0
          %v496 = vmul.f32 %v480, 2.0
          %v497 = vmul.f32 %v481, 2.0
          %v498 = vmul.f32 %v482, 2.0
          %v499 = vmul.f32 %v483, 2.0
          %v500 = vmul.f32 %v484, 2.0
          %v501 = vmul.f32 %v485, 2.0
          %v502 = vmul.f32 %v486, 2.0
          %v503 = vadd.f32 %v495, %v487
          %v504 = vadd.f32 %v496, %v488
          %v505 = vadd.f32 %v497, %v489
          %v506 = vadd.f32 %v498, %v490
          %v507 = vadd.f32 %v499, %v491
          %v508 = vadd.f32 %v500, %v492
          %v509 = vadd.f32 %v501, %v493
          %v510 = vadd.f32 %v502, %v494
          %v511 = vmul.f32 %v423, %v503
          %v512 = vmul.f32 %v424, %v504
          %v513 = vmul.f32 %v425, %v505
          %v514 = vmul.f32 %v426, %v506
          %v515 = vmul.f32 %v427, %v507
          %v516 = vmul.f32 %v428, %v508
          %v517 = vmul.f32 %v429, %v509
          %v518 = vmul.f32 %v430, %v510
          %v519 = vmul.f32 %v487, %v263
          %v520 = vmul.f32 %v488, %v264
          %v521 = vmul.f32 %v489, %v265
          %v522 = vmul.f32 %v490, %v266
          %v523 = vmul.f32 %v491, %v267
          %v524 = vmul.f32 %v492, %v268
          %v525 = vmul.f32 %v493, %v269
          %v526 = vmul.f32 %v494, %v270
          %v527 = vadd.f32 %v511, %v519
          %v528 = vadd.f32 %v512, %v520
          %v529 = vadd.f32 %v513, %v521
          %v530 = vadd.f32 %v514, %v522
          %v531 = vadd.f32 %v515, %v523
          %v532 = vadd.f32 %v516, %v524
          %v533 = vadd.f32 %v517, %v525
          %v534 = vadd.f32 %v518, %v526
          %vm535 = vcmp.ne.f32.partialorder %v271, -100.0
          %vm536 = vcmp.ne.f32.partialorder %v272, -100.0
          %vm537 = vcmp.ne.f32.partialorder %v273, -100.0
          %vm538 = vcmp.ne.f32.partialorder %v274, -100.0
          %vm539 = vcmp.ne.f32.partialorder %v275, -100.0
          %vm540 = vcmp.ne.f32.partialorder %v276, -100.0
          %vm541 = vcmp.ne.f32.partialorder %v277, -100.0
          %vm542 = vcmp.ne.f32.partialorder %v278, -100.0
          %v543 = vsel %vm535, 1, 0
          %v544 = vsel %vm536, 1, 0
          %v545 = vsel %vm537, 1, 0
          %v546 = vsel %vm538, 1, 0
          %v547 = vsel %vm539, 1, 0
          %v548 = vsel %vm540, 1, 0
          %v549 = vsel %vm541, 1, 0
          %v550 = vsel %vm542, 1, 0
          %v551 = vcvt.s32.f32 %v543
          %v552 = vcvt.s32.f32 %v544
          %v553 = vcvt.s32.f32 %v545
          %v554 = vcvt.s32.f32 %v546
          %v555 = vcvt.s32.f32 %v547
          %v556 = vcvt.s32.f32 %v548
          %v557 = vcvt.s32.f32 %v549
          %v558 = vcvt.s32.f32 %v550
          %v559 = vmul.f32 %v527, %v551
          %v560 = vmul.f32 %v528, %v552
          %v561 = vmul.f32 %v529, %v553
          %v562 = vmul.f32 %v530, %v554
          %v563 = vmul.f32 %v531, %v555
          %v564 = vmul.f32 %v532, %v556
          %v565 = vmul.f32 %v533, %v557
          %v566 = vmul.f32 %v534, %v558
          %v567 = vmul.f32 %v440, %v271
          %v568 = vmul.f32 %v442, %v272
          %v569 = vmul.f32 %v444, %v273
          %v570 = vmul.f32 %v446, %v274
          %v571 = vmul.f32 %v448, %v275
          %v572 = vmul.f32 %v450, %v276
          %v573 = vmul.f32 %v452, %v277
          %v574 = vmul.f32 %v454, %v278
          %v575 = vadd.f32 %v567, %v568
          %v576 = vadd.f32 %v575, %v569
          %v577 = vadd.f32 %v576, %v570
          %v578 = vadd.f32 %v577, %v571
          %v579 = vadd.f32 %v578, %v572
          %v580 = vadd.f32 %v579, %v573
          %v581 = vadd.f32 %v580, %v574
          %v582 = vadd.f32 %v581, 0.0
          %v583 = vadd.f32 %v440, %v442
          %v584 = vadd.f32 %v583, %v444
          %v585 = vadd.f32 %v584, %v446
          %v586 = vadd.f32 %v585, %v448
          %v587 = vadd.f32 %v586, %v450
          %v588 = vadd.f32 %v587, %v452
          %v589 = vadd.f32 %v588, %v454
          %v590 = vadd.f32 %v589, 0.0
          %v591 = vadd.f32 %v271, %v272
          %v592 = vadd.f32 %v591, %v273
          %v593 = vadd.f32 %v592, %v274
          %v594 = vadd.f32 %v593, %v275
          %v595 = vadd.f32 %v594, %v276
          %v596 = vadd.f32 %v595, %v277
          %v597 = vadd.f32 %v596, %v278
          %v598 = vadd.f32 %v597, 0.0
          %v599 = vadd.f32 %v559, %v560
          %v600 = vadd.f32 %v599, %v561
          %v601 = vadd.f32 %v600, %v562
          %v602 = vadd.f32 %v601, %v563
          %v603 = vadd.f32 %v602, %v564
          %v604 = vadd.f32 %v603, %v565
          %v605 = vadd.f32 %v604, %v566
          %v606 = vadd.f32 %v605, 0.0
          %v607 = vld [vmem:[%s237] sm:$0xff]
          %v608 = vadd.f32 %v607, %v582
          %609 = vst [vmem:[%s237] sm:$0xff] %v608
          %s610 = scalar_lea.vmem %s237, 8 [#allocation7]
          %v611 = vld [vmem:[%s610] sm:$0xff]
          %v612 = vadd.f32 %v611, %v590
          %613 = vst [vmem:[%s610] sm:$0xff] %v612
          %s614 = scalar_lea.vmem %s237, 16 [#allocation7]
          %v615 = vld [vmem:[%s614] sm:$0xff]
          %v616 = vadd.f32 %v615, %v598
          %617 = vst [vmem:[%s614] sm:$0xff] %v616
          %s618 = scalar_lea.vmem %s237, 24 [#allocation7]
          %v619 = vld [vmem:[%s618] sm:$0xff]
          %v620 = vadd.f32 %v619, %v606
          %621 = vst [vmem:[%s618] sm:$0xff] %v620
        $region44: #{tpu_custom_call.1} parent=27 // pred_fallthru
          _
        %s622 = sand.u32 %s110, 1
        %s623 = scalar_lea.sflag [#allocation4], %s622
        %s624 = sand.u32 %s110, 1
        %s625 = smul.addr %s624, 32
        %s626 = scalar_lea.vmem [#allocation7], %s625
        // Predicated region
        $region45: #{tpu_custom_call.1} parent=27 // pred_check
          %p627 = pneg %p120
        $region46: #{tpu_custom_call.1} parent=27 // pred_check_branch
          %629 = sbr.rel (%p627) target = $region48
        $region47: #{tpu_custom_call.1} parent=27 // pred_region
          %s631 = ssub.s32 512, 512
          %632 = vsyncadd %s623, %s631
          %s633 = smul.addr %s26, 4
          %s634 = smul.addr %s633, 128
          %s635 = scalar_lea.hbm %s2, %s634
          %s636 = sshll.u32 %s626, 4
          %s637 = int_to_ptr.vmem [resolvable:$true] %s636
          %642 = dma.vmem_to_hbm [thread:$0]  %s637, 512, %s635, %s623, 128, 128, 8
        $region48: #{tpu_custom_call.1} parent=27 // pred_fallthru
          _
      $region28: #{tpu_custom_call.1} parent=5 // pred_fallthru
        _
      %p643 = scmp.le.s32.totalorder 2, %s17
      // Predicated region
      $region49: #{tpu_custom_call.1} parent=5 // pred_check
        %p644 = pneg %p643
      $region50: #{tpu_custom_call.1} parent=5 // pred_check_branch
        %646 = sbr.rel (%p644) target = $region52
      $region51: #{tpu_custom_call.1} parent=5 // pred_region
        %s647 = ssub.s32 %s17, 2
        // Predicated region
        $region53: #{tpu_custom_call.1} parent=51 // pred_check
          %p648 = pneg %p126
        $region54: #{tpu_custom_call.1} parent=51 // pred_check_branch
          %650 = sbr.rel (%p648) target = $region56
        $region55: #{tpu_custom_call.1} parent=51 // pred_region
          %s651 = sand.u32 %s111, 1
          %s652 = scalar_lea.sflag [#allocation4], %s651
          %s653 = sand.u32 %s111, 1
          %s654 = smul.addr %s653, 32
          %s655 = scalar_lea.vmem [#allocation7], %s654
          %656 = dma.done %s652, 512
        $region56: #{tpu_custom_call.1} parent=51 // pred_fallthru
          _
      $region52: #{tpu_custom_call.1} parent=5 // pred_fallthru
        _
    $region6: #{tpu_custom_call.1} parent=1 // loop_footer
      %s21 = sadd.s32 1, %s17
    $region7: #{tpu_custom_call.1} parent=1 // loop_footer_branch
      %16 = sbr.rel target = $region3
    $region8: #{tpu_custom_call.1} parent=1 // loop_exit
      _
    %657 = vsyncpa [#allocation3], 1
    %s658 = scalar_lea.sflag [#allocation3], 1
    %659 = vsyncpa %s658, 1
    %660 = vsyncpa [#allocation6], 1
    %s661 = scalar_lea.sflag [#allocation6], 1
    %662 = vsyncpa %s661, 1
    %663 = vsyncpa [#allocation4], 1
    %s664 = scalar_lea.sflag [#allocation4], 1
    %665 = vsyncpa %s664, 1

</llo_original>
